<compile_context>
chip_gen: v7x
topology: tpu7x:2x2x1
jax: 0.10.0
libtpu: 0.0.40
codegen_flags: <defaults>
</compile_context>

<pallas_src>
import functools

import jax
import jax.numpy as jnp
from jax.experimental import pallas as pl
from jax.experimental.pallas import tpu as pltpu


def _fused_conv_chain_kernel(x_ref, w_ref, b_ref, m_ref, o_ref, pad_ref, tap_ref,
                             *, H, W, n_layers, nb, guard):
    """Runs all n 3x3 same-padding conv layers for nb batch elements.

    x_ref:   (nb, C, H*W)       input activations, spatial flattened into lanes
    w_ref:   (n, Cout, 9*Cin)   packed per-layer weights (col = t*Cin + cin,
                                tap t = ky*3 + kx, offsets dy=ky-1, dx=kx-1), bf16
    b_ref:   (n, Cout, 1)       per-layer bias, f32
    m_ref:   (2, 1, H*W)        0/1 destination-column masks for dx = -1 / +1
    o_ref:   (nb, C, H*W)       output activations (lane-dense store)
    pad_ref: (C, pad_w)         zero-guarded f32 staging buffer (shared guards)
    tap_ref: (9*C, nb*H*W)      f32 tap matrix staging for the single dot
    """
    C = x_ref.shape[1]
    HW = H * W
    seg = guard + HW                        # stride between guard starts

    # Zero ONLY the guard regions (interiors are fully overwritten each layer).
    zg = jnp.zeros((C, guard), dtype=pad_ref.dtype)
    for g in range(nb + 1):
        pad_ref[:, pl.ds(g * seg, guard)] = zg

    # Hoisted 0/1 column-validity masks (f32; VPU math kept f32 for v5e).
    mL = jnp.broadcast_to(m_ref[0], (C, HW))    # for dx = -1 taps
    mR = jnp.broadcast_to(m_ref[1], (C, HW))    # for dx = +1 taps

    taps = [(dy, dx) for dy in (-1, 0, 1) for dx in (-1, 0, 1)]

    # Activation with the nb images concatenated along lanes: (C, nb*HW), f32.
    if nb == 1:
        a = x_ref[0].astype(jnp.float32)
    else:
        a = jnp.concatenate([x_ref[i].astype(jnp.float32) for i in range(nb)],
                            axis=1)

    for layer in range(n_layers):                       # n is small: unrolled
        # Stage the activation into the zero-guarded halo buffer (lane-aligned).
        for i in range(nb):
            pad_ref[:, pl.ds(guard + i * seg, HW)] = a[:, i * HW:(i + 1) * HW]

        # Build the (9*Cin, nb*HW) tap matrix: 9 shifted contiguous window
        # copies; the +-1 flattened shift's row wrap is killed by the hoisted
        # 0/1 masks; top/bottom padding comes from the zero guards for free.
        for t, (dy, dx) in enumerate(taps):
            shift = dy * W + dx
            for i in range(nb):
                tap = pad_ref[:, pl.ds(guard + i * seg + shift, HW)]
                if dx == -1:
                    tap = tap * mL
                elif dx == 1:
                    tap = tap * mR
                tap_ref[pl.ds(t * C, C), pl.ds(i * HW, HW)] = tap

        # Single MXU dot per layer: bf16 operands, f32 accumulate, f32 bias.
        a = jnp.dot(w_ref[layer], tap_ref[...].astype(jnp.bfloat16),
                    preferred_element_type=jnp.float32) + b_ref[layer]

    for i in range(nb):
        o_ref[i] = a[:, i * HW:(i + 1) * HW].astype(o_ref.dtype)


def _stitchable_pallas(x_nchw, w_all, b_all):
    """Fused conv chain. x_nchw: (N,C,H,W); w_all: (n,C,9C) bf16; b_all: (n,C,1) f32."""
    N, C, H, W = x_nchw.shape
    n_layers = w_all.shape[0]
    HW = H * W

    # Guard (halo) sizing: needs >= W+1 cells on each side; 128 keeps the
    # interior staging stores lane-aligned. Guards are shared between adjacent
    # per-image segments.
    guard = 128
    assert W + 1 <= guard, "guard sizing assumes W < 128"

    # nb images per grid step: N//2 when N is even so the grid has exactly 2
    # fat steps (uses both v7x TensorCores, amortizes per-step overhead on all
    # generations); otherwise 1 image per step.
    nb = (N // 2) if (N % 2 == 0 and N >= 2) else 1
    steps = N // nb
    pad_w = guard + nb * (HW + guard)

    # Lane-dense spatial-in-lane layout; contiguous reshape is free.
    x2 = x_nchw.reshape(N, C, HW)

    # 0/1 destination-column masks for the dx = -1 / dx = +1 taps.
    col = jnp.arange(HW, dtype=jnp.int32) % W
    m_all = jnp.stack([(col >= 1).astype(jnp.float32),
                       (col <= W - 2).astype(jnp.float32)]).reshape(2, 1, HW)

    kernel = functools.partial(_fused_conv_chain_kernel,
                               H=H, W=W, n_layers=n_layers, nb=nb, guard=guard)
    out = pl.pallas_call(
        kernel,
        out_shape=jax.ShapeDtypeStruct((N, C, HW), x_nchw.dtype),
        grid=(steps,),
        in_specs=[
            pl.BlockSpec((nb, C, HW), lambda bi: (bi, 0, 0)),
            pl.BlockSpec((n_layers, C, 9 * C), lambda bi: (0, 0, 0)),
            pl.BlockSpec((n_layers, C, 1), lambda bi: (0, 0, 0)),
            pl.BlockSpec((2, 1, HW), lambda bi: (0, 0, 0)),
        ],
        out_specs=pl.BlockSpec((nb, C, HW), lambda bi: (bi, 0, 0)),
        scratch_shapes=[pltpu.VMEM((C, pad_w), jnp.float32),
                        pltpu.VMEM((9 * C, nb * HW), jnp.float32)],
        compiler_params=pltpu.CompilerParams(
            dimension_semantics=("parallel",)),
    )(x2, w_all, b_all, m_all)
    return out.reshape(N, C, H, W)


def init_stitchable_model_params(key, ch, n):
    """Deterministic params mimicking nn.Conv2d default init (kaiming-uniform-ish)."""
    params = []
    fan_in = ch * 3 * 3
    bound = 1.0 / jnp.sqrt(float(fan_in))
    for i in range(n):
        kw, kb = jax.random.split(jax.random.fold_in(key, i))
        w = jax.random.uniform(kw, (3, 3, ch, ch), jnp.float32, -bound, bound)
        b = jax.random.uniform(kb, (ch,), jnp.float32, -bound, bound)
        params.append((w, b))
    return params


@functools.partial(jax.jit, static_argnums=(2,))
def stitchable_model_forward(x_nchw, flat_params, n):
    """Forward pass of StitchableModel. Input/output in NCHW like the PyTorch module."""
    N, C, H, W = x_nchw.shape
    w_packed, biases = [], []
    for i in range(n):
        w, b = flat_params[2 * i], flat_params[2 * i + 1]
        # (3,3,Cin,Cout) -> (Cout, ky, kx, Cin) -> (Cout, 9*Cin); col = t*Cin+cin.
        w_packed.append(jnp.transpose(w, (3, 0, 1, 2)).reshape(C, 9 * C))
        biases.append(b.reshape(C, 1))
    w_all = jnp.stack(w_packed, axis=0).astype(jnp.bfloat16)  # (n, Cout, 9*Cin)
    b_all = jnp.stack(biases, axis=0)                         # (n, Cout, 1) f32
    return _stitchable_pallas(x_nchw, w_all, b_all)


def _reference_forward_f32(x_nchw, flat_params, n):
    """Pure-JAX full-f32 reference (true module semantics)."""
    x = x_nchw
    for i in range(n):
        w, b = flat_params[2 * i], flat_params[2 * i + 1]
        w_oihw = jnp.transpose(w, (3, 2, 0, 1))
        x = jax.lax.conv_general_dilated(
            x, w_oihw, window_strides=(1, 1), padding=((1, 1), (1, 1)),
            dimension_numbers=("NCHW", "OIHW", "NCHW"))
        x = x + b[None, :, None, None]
    return x


def _reference_forward_bf16(x_nchw, flat_params, n):
    """Precision-matched reference: bf16 weights/activations, f32 accumulation."""
    x = x_nchw
    for i in range(n):
        w, b = flat_params[2 * i], flat_params[2 * i + 1]
        w_oihw = jnp.transpose(w, (3, 2, 0, 1)).astype(jnp.bfloat16)
        x = jax.lax.conv_general_dilated(
            x.astype(jnp.bfloat16), w_oihw, window_strides=(1, 1),
            padding=((1, 1), (1, 1)),
            dimension_numbers=("NCHW", "OIHW", "NCHW"),
            preferred_element_type=jnp.float32)
        x = x + b[None, :, None, None]
    return x


if __name__ == "__main__":
    ch, n = 4, 2
    N, H, W = 2, 16, 16

    key = jax.random.PRNGKey(0)
    kx, kp = jax.random.split(key)
    x = jax.random.normal(kx, (N, ch, H, W), jnp.float32)       # NCHW input
    params = init_stitchable_model_params(kp, ch, n)
    flat_params = tuple(p for wb in params for p in wb)

    out = stitchable_model_forward(x, flat_params, n)
    out = jax.block_until_ready(out)
    assert out.shape == (N, ch, H, W)

    # Tight check against the precision-matched (bf16 operands, f32 accum) reference.
    ref_bf16 = _reference_forward_bf16(x, flat_params, n)
    assert jnp.allclose(out, ref_bf16, atol=1e-3, rtol=1e-3), "mismatch vs bf16 reference"

    # Loose sanity check against the full-f32 module reference.
    ref_f32 = _reference_forward_f32(x, flat_params, n)
    assert jnp.allclose(out, ref_f32, atol=5e-2, rtol=5e-2), "mismatch vs f32 reference"

    print("KERNEL_OK")
</pallas_src>

<mosaic_0001>
module attributes {stable_mosaic.version = 11 : i64} {
  func.func @_fused_conv_chain_kernel(%arg0: i32, %arg1: memref<1x4x256xf32, #tpu.memory_space<vmem>>, %arg2: memref<2x4x36xbf16, #tpu.memory_space<vmem>>, %arg3: memref<2x4x1xf32, #tpu.memory_space<vmem>>, %arg4: memref<2x1x256xf32, #tpu.memory_space<vmem>>, %arg5: memref<1x4x256xf32, #tpu.memory_space<vmem>>, %arg6: memref<4x512xf32, #tpu.memory_space<vmem>>, %arg7: memref<36x256xf32, #tpu.memory_space<vmem>>) attributes {dimension_semantics = [#tpu.dimension_semantics<parallel>], iteration_bounds = array<i64: 2>, scalar_prefetch = 0 : i64, scratch_operands = 2 : i64, tpu.core_type = #tpu.core_type<tc>, window_params = [{transform_indices = @transform_0, window_bounds = array<i64: 1, 4, 256>}, {pipeline_mode = #tpu.pipeline_mode<synchronous>, transform_indices = @transform_1, window_bounds = array<i64: 2, 4, 36>}, {pipeline_mode = #tpu.pipeline_mode<synchronous>, transform_indices = @transform_2, window_bounds = array<i64: 2, 4, 1>}, {pipeline_mode = #tpu.pipeline_mode<synchronous>, transform_indices = @transform_3, window_bounds = array<i64: 2, 1, 256>}, {transform_indices = @transform_4, window_bounds = array<i64: 1, 4, 256>}]} {
    %cst = arith.constant 0.000000e+00 : f32
    %0 = vector.broadcast %cst : f32 to vector<4x128xf32>
    %c0 = arith.constant 0 : index
    %c0_0 = arith.constant 0 : index
    %1 = vector.load %arg6[%c0, %c0_0] : memref<4x512xf32, #tpu.memory_space<vmem>>, vector<4x128xf32>
    tpu.vector_store %arg6[%c0, %c0_0], %0 {strides = array<i32>} : memref<4x512xf32, #tpu.memory_space<vmem>>, vector<4x128xf32>,
    %c0_1 = arith.constant 0 : index
    %c384 = arith.constant 384 : index
    %2 = vector.load %arg6[%c0_1, %c384] : memref<4x512xf32, #tpu.memory_space<vmem>>, vector<4x128xf32>
    tpu.vector_store %arg6[%c0_1, %c384], %0 {strides = array<i32>} : memref<4x512xf32, #tpu.memory_space<vmem>>, vector<4x128xf32>,
    %c0_2 = arith.constant 0 : index
    %c0_3 = arith.constant 0 : index
    %c0_4 = arith.constant 0 : index
    %3 = vector.load %arg4[%c0_2, %c0_3, %c0_4] : memref<2x1x256xf32, #tpu.memory_space<vmem>>, vector<1x1x256xf32>
    %4 = vector.shape_cast %3 : vector<1x1x256xf32> to vector<1x256xf32>
    %5 = vector.shape_cast %4 : vector<1x256xf32> to vector<1x256xf32>
    %6 = vector.broadcast %5 : vector<1x256xf32> to vector<4x256xf32>
    %c1 = arith.constant 1 : index
    %c0_5 = arith.constant 0 : index
    %c0_6 = arith.constant 0 : index
    %7 = vector.load %arg4[%c1, %c0_5, %c0_6] : memref<2x1x256xf32, #tpu.memory_space<vmem>>, vector<1x1x256xf32>
    %8 = vector.shape_cast %7 : vector<1x1x256xf32> to vector<1x256xf32>
    %9 = vector.shape_cast %8 : vector<1x256xf32> to vector<1x256xf32>
    %10 = vector.broadcast %9 : vector<1x256xf32> to vector<4x256xf32>
    %c0_7 = arith.constant 0 : index
    %c0_8 = arith.constant 0 : index
    %c0_9 = arith.constant 0 : index
    %11 = vector.load %arg1[%c0_7, %c0_8, %c0_9] : memref<1x4x256xf32, #tpu.memory_space<vmem>>, vector<1x4x256xf32>
    %12 = vector.shape_cast %11 : vector<1x4x256xf32> to vector<4x256xf32>
    %c0_10 = arith.constant 0 : index
    %c128 = arith.constant 128 : index
    %13 = vector.load %arg6[%c0_10, %c128] : memref<4x512xf32, #tpu.memory_space<vmem>>, vector<4x256xf32>
    tpu.vector_store %arg6[%c0_10, %c128], %12 {strides = array<i32>} : memref<4x512xf32, #tpu.memory_space<vmem>>, vector<4x256xf32>,
    %c0_11 = arith.constant 0 : index
    %c111 = arith.constant 111 : index
    %14 = vector.load %arg6[%c0_11, %c111] : memref<4x512xf32, #tpu.memory_space<vmem>>, vector<4x256xf32>
    %15 = arith.mulf %14, %6 : vector<4x256xf32>
    %c0_12 = arith.constant 0 : index
    %c0_13 = arith.constant 0 : index
    %16 = vector.load %arg7[%c0_12, %c0_13] : memref<36x256xf32, #tpu.memory_space<vmem>>, vector<4x256xf32>
    tpu.vector_store %arg7[%c0_12, %c0_13], %15 {strides = array<i32>} : memref<36x256xf32, #tpu.memory_space<vmem>>, vector<4x256xf32>,
    %c0_14 = arith.constant 0 : index
    %c112 = arith.constant 112 : index
    %17 = vector.load %arg6[%c0_14, %c112] : memref<4x512xf32, #tpu.memory_space<vmem>>, vector<4x256xf32>
    %c4 = arith.constant 4 : index
    %c0_15 = arith.constant 0 : index
    %18 = vector.load %arg7[%c4, %c0_15] : memref<36x256xf32, #tpu.memory_space<vmem>>, vector<4x256xf32>
    tpu.vector_store %arg7[%c4, %c0_15], %17 {strides = array<i32>} : memref<36x256xf32, #tpu.memory_space<vmem>>, vector<4x256xf32>,
    %c0_16 = arith.constant 0 : index
    %c113 = arith.constant 113 : index
    %19 = vector.load %arg6[%c0_16, %c113] : memref<4x512xf32, #tpu.memory_space<vmem>>, vector<4x256xf32>
    %20 = arith.mulf %19, %10 : vector<4x256xf32>
    %c8 = arith.constant 8 : index
    %c0_17 = arith.constant 0 : index
    %21 = vector.load %arg7[%c8, %c0_17] : memref<36x256xf32, #tpu.memory_space<vmem>>, vector<4x256xf32>
    tpu.vector_store %arg7[%c8, %c0_17], %20 {strides = array<i32>} : memref<36x256xf32, #tpu.memory_space<vmem>>, vector<4x256xf32>,
    %c0_18 = arith.constant 0 : index
    %c127 = arith.constant 127 : index
    %22 = vector.load %arg6[%c0_18, %c127] : memref<4x512xf32, #tpu.memory_space<vmem>>, vector<4x256xf32>
    %23 = arith.mulf %22, %6 : vector<4x256xf32>
    %c12 = arith.constant 12 : index
    %c0_19 = arith.constant 0 : index
    %24 = vector.load %arg7[%c12, %c0_19] : memref<36x256xf32, #tpu.memory_space<vmem>>, vector<4x256xf32>
    tpu.vector_store %arg7[%c12, %c0_19], %23 {strides = array<i32>} : memref<36x256xf32, #tpu.memory_space<vmem>>, vector<4x256xf32>,
    %c0_20 = arith.constant 0 : index
    %c128_21 = arith.constant 128 : index
    %25 = vector.load %arg6[%c0_20, %c128_21] : memref<4x512xf32, #tpu.memory_space<vmem>>, vector<4x256xf32>
    %c16 = arith.constant 16 : index
    %c0_22 = arith.constant 0 : index
    %26 = vector.load %arg7[%c16, %c0_22] : memref<36x256xf32, #tpu.memory_space<vmem>>, vector<4x256xf32>
    tpu.vector_store %arg7[%c16, %c0_22], %25 {strides = array<i32>} : memref<36x256xf32, #tpu.memory_space<vmem>>, vector<4x256xf32>,
    %c0_23 = arith.constant 0 : index
    %c129 = arith.constant 129 : index
    %27 = vector.load %arg6[%c0_23, %c129] : memref<4x512xf32, #tpu.memory_space<vmem>>, vector<4x256xf32>
    %28 = arith.mulf %27, %10 : vector<4x256xf32>
    %c20 = arith.constant 20 : index
    %c0_24 = arith.constant 0 : index
    %29 = vector.load %arg7[%c20, %c0_24] : memref<36x256xf32, #tpu.memory_space<vmem>>, vector<4x256xf32>
    tpu.vector_store %arg7[%c20, %c0_24], %28 {strides = array<i32>} : memref<36x256xf32, #tpu.memory_space<vmem>>, vector<4x256xf32>,
    %c0_25 = arith.constant 0 : index
    %c143 = arith.constant 143 : index
    %30 = vector.load %arg6[%c0_25, %c143] : memref<4x512xf32, #tpu.memory_space<vmem>>, vector<4x256xf32>
    %31 = arith.mulf %30, %6 : vector<4x256xf32>
    %c24 = arith.constant 24 : index
    %c0_26 = arith.constant 0 : index
    %32 = vector.load %arg7[%c24, %c0_26] : memref<36x256xf32, #tpu.memory_space<vmem>>, vector<4x256xf32>
    tpu.vector_store %arg7[%c24, %c0_26], %31 {strides = array<i32>} : memref<36x256xf32, #tpu.memory_space<vmem>>, vector<4x256xf32>,
    %c0_27 = arith.constant 0 : index
    %c144 = arith.constant 144 : index
    %33 = vector.load %arg6[%c0_27, %c144] : memref<4x512xf32, #tpu.memory_space<vmem>>, vector<4x256xf32>
    %c28 = arith.constant 28 : index
    %c0_28 = arith.constant 0 : index
    %34 = vector.load %arg7[%c28, %c0_28] : memref<36x256xf32, #tpu.memory_space<vmem>>, vector<4x256xf32>
    tpu.vector_store %arg7[%c28, %c0_28], %33 {strides = array<i32>} : memref<36x256xf32, #tpu.memory_space<vmem>>, vector<4x256xf32>,
    %c0_29 = arith.constant 0 : index
    %c145 = arith.constant 145 : index
    %35 = vector.load %arg6[%c0_29, %c145] : memref<4x512xf32, #tpu.memory_space<vmem>>, vector<4x256xf32>
    %36 = arith.mulf %35, %10 : vector<4x256xf32>
    %c32 = arith.constant 32 : index
    %c0_30 = arith.constant 0 : index
    %37 = vector.load %arg7[%c32, %c0_30] : memref<36x256xf32, #tpu.memory_space<vmem>>, vector<4x256xf32>
    tpu.vector_store %arg7[%c32, %c0_30], %36 {strides = array<i32>} : memref<36x256xf32, #tpu.memory_space<vmem>>, vector<4x256xf32>,
    %c0_31 = arith.constant 0 : index
    %c0_32 = arith.constant 0 : index
    %c0_33 = arith.constant 0 : index
    %38 = vector.load %arg2[%c0_31, %c0_32, %c0_33] : memref<2x4x36xbf16, #tpu.memory_space<vmem>>, vector<1x4x36xbf16>
    %39 = vector.shape_cast %38 : vector<1x4x36xbf16> to vector<4x36xbf16>
    %c0_34 = arith.constant 0 : index
    %c0_35 = arith.constant 0 : index
    %40 = vector.load %arg7[%c0_34, %c0_35] : memref<36x256xf32, #tpu.memory_space<vmem>>, vector<36x256xf32>
    %41 = arith.truncf %40 : vector<36x256xf32> to vector<36x256xbf16>
    %cst_36 = arith.constant dense<0.000000e+00> : vector<4x256xf32>
    %42 = tpu.matmul %39, %41, %cst_36 {dimension_numbers = #tpu.dot_dimension_numbers<[1], [0], [0], [1], [0, 0, 1, 1], [], []>} : vector<4x36xbf16>, vector<36x256xbf16>, vector<4x256xf32> -> vector<4x256xf32>
    %c0_37 = arith.constant 0 : index
    %c0_38 = arith.constant 0 : index
    %c0_39 = arith.constant 0 : index
    %43 = vector.load %arg3[%c0_37, %c0_38, %c0_39] : memref<2x4x1xf32, #tpu.memory_space<vmem>>, vector<1x4x1xf32>
    %44 = vector.shape_cast %43 : vector<1x4x1xf32> to vector<4x1xf32>
    %45 = vector.broadcast %44 : vector<4x1xf32> to vector<4x256xf32>
    %46 = arith.addf %42, %45 : vector<4x256xf32>
    %c0_40 = arith.constant 0 : index
    %c128_41 = arith.constant 128 : index
    %47 = vector.load %arg6[%c0_40, %c128_41] : memref<4x512xf32, #tpu.memory_space<vmem>>, vector<4x256xf32>
    tpu.vector_store %arg6[%c0_40, %c128_41], %46 {strides = array<i32>} : memref<4x512xf32, #tpu.memory_space<vmem>>, vector<4x256xf32>,
    %c0_42 = arith.constant 0 : index
    %c111_43 = arith.constant 111 : index
    %48 = vector.load %arg6[%c0_42, %c111_43] : memref<4x512xf32, #tpu.memory_space<vmem>>, vector<4x256xf32>
    %49 = arith.mulf %48, %6 : vector<4x256xf32>
    %c0_44 = arith.constant 0 : index
    %c0_45 = arith.constant 0 : index
    %50 = vector.load %arg7[%c0_44, %c0_45] : memref<36x256xf32, #tpu.memory_space<vmem>>, vector<4x256xf32>
    tpu.vector_store %arg7[%c0_44, %c0_45], %49 {strides = array<i32>} : memref<36x256xf32, #tpu.memory_space<vmem>>, vector<4x256xf32>,
    %c0_46 = arith.constant 0 : index
    %c112_47 = arith.constant 112 : index
    %51 = vector.load %arg6[%c0_46, %c112_47] : memref<4x512xf32, #tpu.memory_space<vmem>>, vector<4x256xf32>
    %c4_48 = arith.constant 4 : index
    %c0_49 = arith.constant 0 : index
    %52 = vector.load %arg7[%c4_48, %c0_49] : memref<36x256xf32, #tpu.memory_space<vmem>>, vector<4x256xf32>
    tpu.vector_store %arg7[%c4_48, %c0_49], %51 {strides = array<i32>} : memref<36x256xf32, #tpu.memory_space<vmem>>, vector<4x256xf32>,
    %c0_50 = arith.constant 0 : index
    %c113_51 = arith.constant 113 : index
    %53 = vector.load %arg6[%c0_50, %c113_51] : memref<4x512xf32, #tpu.memory_space<vmem>>, vector<4x256xf32>
    %54 = arith.mulf %53, %10 : vector<4x256xf32>
    %c8_52 = arith.constant 8 : index
    %c0_53 = arith.constant 0 : index
    %55 = vector.load %arg7[%c8_52, %c0_53] : memref<36x256xf32, #tpu.memory_space<vmem>>, vector<4x256xf32>
    tpu.vector_store %arg7[%c8_52, %c0_53], %54 {strides = array<i32>} : memref<36x256xf32, #tpu.memory_space<vmem>>, vector<4x256xf32>,
    %c0_54 = arith.constant 0 : index
    %c127_55 = arith.constant 127 : index
    %56 = vector.load %arg6[%c0_54, %c127_55] : memref<4x512xf32, #tpu.memory_space<vmem>>, vector<4x256xf32>
    %57 = arith.mulf %56, %6 : vector<4x256xf32>
    %c12_56 = arith.constant 12 : index
    %c0_57 = arith.constant 0 : index
    %58 = vector.load %arg7[%c12_56, %c0_57] : memref<36x256xf32, #tpu.memory_space<vmem>>, vector<4x256xf32>
    tpu.vector_store %arg7[%c12_56, %c0_57], %57 {strides = array<i32>} : memref<36x256xf32, #tpu.memory_space<vmem>>, vector<4x256xf32>,
    %c0_58 = arith.constant 0 : index
    %c128_59 = arith.constant 128 : index
    %59 = vector.load %arg6[%c0_58, %c128_59] : memref<4x512xf32, #tpu.memory_space<vmem>>, vector<4x256xf32>
    %c16_60 = arith.constant 16 : index
    %c0_61 = arith.constant 0 : index
    %60 = vector.load %arg7[%c16_60, %c0_61] : memref<36x256xf32, #tpu.memory_space<vmem>>, vector<4x256xf32>
    tpu.vector_store %arg7[%c16_60, %c0_61], %59 {strides = array<i32>} : memref<36x256xf32, #tpu.memory_space<vmem>>, vector<4x256xf32>,
    %c0_62 = arith.constant 0 : index
    %c129_63 = arith.constant 129 : index
    %61 = vector.load %arg6[%c0_62, %c129_63] : memref<4x512xf32, #tpu.memory_space<vmem>>, vector<4x256xf32>
    %62 = arith.mulf %61, %10 : vector<4x256xf32>
    %c20_64 = arith.constant 20 : index
    %c0_65 = arith.constant 0 : index
    %63 = vector.load %arg7[%c20_64, %c0_65] : memref<36x256xf32, #tpu.memory_space<vmem>>, vector<4x256xf32>
    tpu.vector_store %arg7[%c20_64, %c0_65], %62 {strides = array<i32>} : memref<36x256xf32, #tpu.memory_space<vmem>>, vector<4x256xf32>,
    %c0_66 = arith.constant 0 : index
    %c143_67 = arith.constant 143 : index
    %64 = vector.load %arg6[%c0_66, %c143_67] : memref<4x512xf32, #tpu.memory_space<vmem>>, vector<4x256xf32>
    %65 = arith.mulf %64, %6 : vector<4x256xf32>
    %c24_68 = arith.constant 24 : index
    %c0_69 = arith.constant 0 : index
    %66 = vector.load %arg7[%c24_68, %c0_69] : memref<36x256xf32, #tpu.memory_space<vmem>>, vector<4x256xf32>
    tpu.vector_store %arg7[%c24_68, %c0_69], %65 {strides = array<i32>} : memref<36x256xf32, #tpu.memory_space<vmem>>, vector<4x256xf32>,
    %c0_70 = arith.constant 0 : index
    %c144_71 = arith.constant 144 : index
    %67 = vector.load %arg6[%c0_70, %c144_71] : memref<4x512xf32, #tpu.memory_space<vmem>>, vector<4x256xf32>
    %c28_72 = arith.constant 28 : index
    %c0_73 = arith.constant 0 : index
    %68 = vector.load %arg7[%c28_72, %c0_73] : memref<36x256xf32, #tpu.memory_space<vmem>>, vector<4x256xf32>
    tpu.vector_store %arg7[%c28_72, %c0_73], %67 {strides = array<i32>} : memref<36x256xf32, #tpu.memory_space<vmem>>, vector<4x256xf32>,
    %c0_74 = arith.constant 0 : index
    %c145_75 = arith.constant 145 : index
    %69 = vector.load %arg6[%c0_74, %c145_75] : memref<4x512xf32, #tpu.memory_space<vmem>>, vector<4x256xf32>
    %70 = arith.mulf %69, %10 : vector<4x256xf32>
    %c32_76 = arith.constant 32 : index
    %c0_77 = arith.constant 0 : index
    %71 = vector.load %arg7[%c32_76, %c0_77] : memref<36x256xf32, #tpu.memory_space<vmem>>, vector<4x256xf32>
    tpu.vector_store %arg7[%c32_76, %c0_77], %70 {strides = array<i32>} : memref<36x256xf32, #tpu.memory_space<vmem>>, vector<4x256xf32>,
    %c1_78 = arith.constant 1 : index
    %c0_79 = arith.constant 0 : index
    %c0_80 = arith.constant 0 : index
    %72 = vector.load %arg2[%c1_78, %c0_79, %c0_80] : memref<2x4x36xbf16, #tpu.memory_space<vmem>>, vector<1x4x36xbf16>
    %73 = vector.shape_cast %72 : vector<1x4x36xbf16> to vector<4x36xbf16>
    %c0_81 = arith.constant 0 : index
    %c0_82 = arith.constant 0 : index
    %74 = vector.load %arg7[%c0_81, %c0_82] : memref<36x256xf32, #tpu.memory_space<vmem>>, vector<36x256xf32>
    %75 = arith.truncf %74 : vector<36x256xf32> to vector<36x256xbf16>
    %cst_83 = arith.constant dense<0.000000e+00> : vector<4x256xf32>
    %76 = tpu.matmul %73, %75, %cst_83 {dimension_numbers = #tpu.dot_dimension_numbers<[1], [0], [0], [1], [0, 0, 1, 1], [], []>} : vector<4x36xbf16>, vector<36x256xbf16>, vector<4x256xf32> -> vector<4x256xf32>
    %c1_84 = arith.constant 1 : index
    %c0_85 = arith.constant 0 : index
    %c0_86 = arith.constant 0 : index
    %77 = vector.load %arg3[%c1_84, %c0_85, %c0_86] : memref<2x4x1xf32, #tpu.memory_space<vmem>>, vector<1x4x1xf32>
    %78 = vector.shape_cast %77 : vector<1x4x1xf32> to vector<4x1xf32>
    %79 = vector.broadcast %78 : vector<4x1xf32> to vector<4x256xf32>
    %80 = arith.addf %76, %79 : vector<4x256xf32>
    %c0_87 = arith.constant 0 : index
    %c0_88 = arith.constant 0 : index
    %c0_89 = arith.constant 0 : index
    %81 = vector.load %arg5[%c0_87, %c0_88, %c0_89] : memref<1x4x256xf32, #tpu.memory_space<vmem>>, vector<1x4x256xf32>
    %82 = vector.shape_cast %81 : vector<1x4x256xf32> to vector<4x256xf32>
    %83 = vector.shape_cast %80 : vector<4x256xf32> to vector<1x4x256xf32>
    tpu.vector_store %arg5[%c0_87, %c0_88, %c0_89], %83 {strides = array<i32>} : memref<1x4x256xf32, #tpu.memory_space<vmem>>, vector<1x4x256xf32>,
    return
  }
  func.func @transform_0(%arg0: i32) -> (i32, i32, i32) {
    %c0_i32 = arith.constant 0 : i32
    %c0_i32_0 = arith.constant 0 : i32
    %c0_i32_1 = arith.constant 0 : i32
    return %arg0, %c0_i32, %c0_i32_0 : i32, i32, i32
  }
  func.func @transform_1(%arg0: i32) -> (i32, i32, i32) {
    %c0_i32 = arith.constant 0 : i32
    %c0_i32_0 = arith.constant 0 : i32
    %c0_i32_1 = arith.constant 0 : i32
    %c0_i32_2 = arith.constant 0 : i32
    return %c0_i32, %c0_i32_0, %c0_i32_1 : i32, i32, i32
  }
  func.func @transform_2(%arg0: i32) -> (i32, i32, i32) {
    %c0_i32 = arith.constant 0 : i32
    %c0_i32_0 = arith.constant 0 : i32
    %c0_i32_1 = arith.constant 0 : i32
    %c0_i32_2 = arith.constant 0 : i32
    return %c0_i32, %c0_i32_0, %c0_i32_1 : i32, i32, i32
  }
  func.func @transform_3(%arg0: i32) -> (i32, i32, i32) {
    %c0_i32 = arith.constant 0 : i32
    %c0_i32_0 = arith.constant 0 : i32
    %c0_i32_1 = arith.constant 0 : i32
    %c0_i32_2 = arith.constant 0 : i32
    return %c0_i32, %c0_i32_0, %c0_i32_1 : i32, i32, i32
  }
  func.func @transform_4(%arg0: i32) -> (i32, i32, i32) {
    %c0_i32 = arith.constant 0 : i32
    %c0_i32_0 = arith.constant 0 : i32
    %c0_i32_1 = arith.constant 0 : i32
    return %arg0, %c0_i32, %c0_i32_0 : i32, i32, i32
  }
}

</mosaic_0001>

<llo_original>
// kernel: stitchable_model_forward.1
$region0: #{stitchable_model_forward.1}
  #allocation0 [shape = 'u32[]', space=smem, size = 0x4, offset = 0x4, fixed_abs, tag = 'smem constant byte address 0x4 - core index']
  #allocation1 [shape = 'u32[144,128]{1,0:T(1,128)}', space=vmem, size = 0x12000, scoped, tag = 'internal scratch']
  #allocation2 [shape = 'f32[4,512]{1,0:T(4,128)}', space=vmem, size = 0x2000, scoped, tag = 'scratch operand']
  #allocation3 [shape = 'f32[36,256]{1,0:T(8,128)}', space=vmem, size = 0xa000, scoped, tag = 'scratch operand']
  %s0 = inlined_call_operand.vmem [shape: f32[2,4,256], index: 0, kind: input, shape index: {}]
  %s1 = inlined_call_operand.vmem [shape: bf16[2,4,36], index: 1, kind: input, shape index: {}]
  %s2 = inlined_call_operand.vmem [shape: f32[2,4,1], index: 2, kind: input, shape index: {}]
  %s3 = inlined_call_operand.vmem [shape: f32[2,1,256], index: 3, kind: input, shape index: {}]
  %s4 = inlined_call_operand.vmem [shape: f32[2,4,256], index: 4, kind: output, shape index: {}]
  %s5 = sld [smem:[#allocation0]]
  $region49: #{stitchable_model_forward.1} parent=0
    _
  %s7 = ssub.s32 1, %s5
  %s8 = scalar_select 0, %s7, %s5
  loop: start=0, step=1, limit=4
  $region2: #{stitchable_model_forward.1} parent=0 // loop_pre_header
    _
  $region3: #{stitchable_model_forward.1} parent=0 // loop_header
    %s10 = sphi 0, %s14
    %p11 = scmp.ge.s32.totalorder %s10, 4
    %s20 = sphi 0, %s22
    %s23 = sphi 0, %s20
    %s24 = sphi 0, %s23
    %s40 = sphi 0, %s24
    %s44 = sphi 0, %s44
    %s46 = sphi 0, %s44
    %s47 = sphi 0, %s46
    %s61 = sphi 0, %s47
    %s65 = sphi 0, %s65
    %s67 = sphi 0, %s65
    %s68 = sphi 0, %s67
    %s82 = sphi 0, %s68
    %s86 = sphi 0, %s86
    %s88 = sphi 0, %s86
    %s89 = sphi 0, %s88
    %s103 = sphi 0, %s89
    %s109 = sphi 0, %s111
    %s112 = sphi 0, %s109
    %s113 = sphi 0, %s112
    %s129 = sphi 0, %s113
  $region4: #{stitchable_model_forward.1} parent=0 // loop_header_branch
    %13 = sbr.rel (%p11) target = $region8
  $region5: #{stitchable_model_forward.1} parent=0 // loop_body
    %s15 = ssub.s32 %s10, 1
    %s16 = ssub.s32 %s10, 2
    %s17 = sadd.s32 %s10, 1
    %s18 = ssub.s32 %s10, %s17
    %p19 = scmp.eq.s32.totalorder %s18, 0
    %s21 = sadd.s32 %s20, 1
    %s22 = scalar_select %p19, %s20, %s21
    %p25 = pneg %p19
    %p26 = scmp.eq.s32.totalorder %s10, 1
    %p27 = por %p25, %p26
    %p28 = scmp.ne.s32.totalorder %s20, %s23
    %p29 = scmp.eq.s32.totalorder %s10, 0
    %p30 = por %p28, %p29
    %p31 = scmp.ne.s32.totalorder %s20, %s23
    %p32 = scmp.eq.s32.totalorder %s15, 1
    %p33 = por %p31, %p32
    %p34 = scmp.ne.s32.totalorder %s23, %s24
    %p35 = scmp.eq.s32.totalorder %s15, 0
    %p36 = por %p34, %p35
    %p37 = scmp.ne.s32.totalorder %s23, %s24
    %p38 = scmp.eq.s32.totalorder %s16, 1
    %p39 = por %p37, %p38
    %p41 = scmp.ne.s32.totalorder %s24, %s40
    %p42 = scmp.eq.s32.totalorder %s16, 0
    %p43 = por %p41, %p42
    %s45 = sadd.s32 %s44, 1
    %p48 = scmp.eq.s32.totalorder %s10, 1
    %p49 = scmp.ne.s32.totalorder %s44, %s46
    %p50 = scmp.eq.s32.totalorder %s10, 0
    %p51 = por %p49, %p50
    %p52 = scmp.ne.s32.totalorder %s44, %s46
    %p53 = scmp.eq.s32.totalorder %s15, 1
    %p54 = por %p52, %p53
    %p55 = scmp.ne.s32.totalorder %s46, %s47
    %p56 = scmp.eq.s32.totalorder %s15, 0
    %p57 = por %p55, %p56
    %p58 = scmp.ne.s32.totalorder %s46, %s47
    %p59 = scmp.eq.s32.totalorder %s16, 1
    %p60 = por %p58, %p59
    %p62 = scmp.ne.s32.totalorder %s47, %s61
    %p63 = scmp.eq.s32.totalorder %s16, 0
    %p64 = por %p62, %p63
    %s66 = sadd.s32 %s65, 1
    %p69 = scmp.eq.s32.totalorder %s10, 1
    %p70 = scmp.ne.s32.totalorder %s65, %s67
    %p71 = scmp.eq.s32.totalorder %s10, 0
    %p72 = por %p70, %p71
    %p73 = scmp.ne.s32.totalorder %s65, %s67
    %p74 = scmp.eq.s32.totalorder %s15, 1
    %p75 = por %p73, %p74
    %p76 = scmp.ne.s32.totalorder %s67, %s68
    %p77 = scmp.eq.s32.totalorder %s15, 0
    %p78 = por %p76, %p77
    %p79 = scmp.ne.s32.totalorder %s67, %s68
    %p80 = scmp.eq.s32.totalorder %s16, 1
    %p81 = por %p79, %p80
    %p83 = scmp.ne.s32.totalorder %s68, %s82
    %p84 = scmp.eq.s32.totalorder %s16, 0
    %p85 = por %p83, %p84
    %s87 = sadd.s32 %s86, 1
    %p90 = scmp.eq.s32.totalorder %s10, 1
    %p91 = scmp.ne.s32.totalorder %s86, %s88
    %p92 = scmp.eq.s32.totalorder %s10, 0
    %p93 = por %p91, %p92
    %p94 = scmp.ne.s32.totalorder %s86, %s88
    %p95 = scmp.eq.s32.totalorder %s15, 1
    %p96 = por %p94, %p95
    %p97 = scmp.ne.s32.totalorder %s88, %s89
    %p98 = scmp.eq.s32.totalorder %s15, 0
    %p99 = por %p97, %p98
    %p100 = scmp.ne.s32.totalorder %s88, %s89
    %p101 = scmp.eq.s32.totalorder %s16, 1
    %p102 = por %p100, %p101
    %p104 = scmp.ne.s32.totalorder %s89, %s103
    %p105 = scmp.eq.s32.totalorder %s16, 0
    %p106 = por %p104, %p105
    %s107 = ssub.s32 %s10, %s17
    %p108 = scmp.eq.s32.totalorder %s107, 0
    %s110 = sadd.s32 %s109, 1
    %s111 = scalar_select %p108, %s109, %s110
    %p114 = pneg %p108
    %p115 = scmp.eq.s32.totalorder %s10, 1
    %p116 = por %p114, %p115
    %p117 = scmp.ne.s32.totalorder %s109, %s112
    %p118 = scmp.eq.s32.totalorder %s10, 0
    %p119 = por %p117, %p118
    %p120 = scmp.ne.s32.totalorder %s109, %s112
    %p121 = scmp.eq.s32.totalorder %s15, 1
    %p122 = por %p120, %p121
    %p123 = scmp.ne.s32.totalorder %s112, %s113
    %p124 = scmp.eq.s32.totalorder %s15, 0
    %p125 = por %p123, %p124
    %p126 = scmp.ne.s32.totalorder %s112, %s113
    %p127 = scmp.eq.s32.totalorder %s16, 1
    %p128 = por %p126, %p127
    %p130 = scmp.ne.s32.totalorder %s113, %s129
    %p131 = scmp.eq.s32.totalorder %s16, 0
    %p132 = por %p130, %p131
    %p133 = scmp.le.s32.totalorder 1, %s10
    %p134 = scmp.lt.s32.totalorder %s10, 3
    %p135 = pnand %p133, %p134
    %p136 = pneg %p135
    // Predicated region
    $region9: #{stitchable_model_forward.1} parent=5 // pred_check
      _
    $region10: #{stitchable_model_forward.1} parent=5 // pred_check_branch
      %138 = sbr.rel (%p135) target = $region12
    $region11: #{stitchable_model_forward.1} parent=5 // pred_region
      %s139 = ssub.s32 %s10, 1
      // Predicated region
      $region13: #{stitchable_model_forward.1} parent=11 // pred_check
        %p140 = pneg %p57
      $region14: #{stitchable_model_forward.1} parent=11 // pred_check_branch
        %142 = sbr.rel (%p140) target = $region16
      $region15: #{stitchable_model_forward.1} parent=11 // pred_region
        _
      $region16: #{stitchable_model_forward.1} parent=11 // pred_fallthru
        _
      // Predicated region
      $region17: #{stitchable_model_forward.1} parent=11 // pred_check
        %p143 = pneg %p78
      $region18: #{stitchable_model_forward.1} parent=11 // pred_check_branch
        %145 = sbr.rel (%p143) target = $region20
      $region19: #{stitchable_model_forward.1} parent=11 // pred_region
        _
      $region20: #{stitchable_model_forward.1} parent=11 // pred_fallthru
        _
      // Predicated region
      $region21: #{stitchable_model_forward.1} parent=11 // pred_check
        %p146 = pneg %p99
      $region22: #{stitchable_model_forward.1} parent=11 // pred_check_branch
        %148 = sbr.rel (%p146) target = $region24
      $region23: #{stitchable_model_forward.1} parent=11 // pred_region
        _
      $region24: #{stitchable_model_forward.1} parent=11 // pred_fallthru
        _
    $region12: #{stitchable_model_forward.1} parent=5 // pred_fallthru
      _
    %p149 = scmp.lt.s32.totalorder %s10, 2
    // Predicated region
    $region25: #{stitchable_model_forward.1} parent=5 // pred_check
      %p150 = pneg %p149
    $region26: #{stitchable_model_forward.1} parent=5 // pred_check_branch
      %152 = sbr.rel (%p150) target = $region28
    $region27: #{stitchable_model_forward.1} parent=5 // pred_region
      // Predicated region
      $region29: #{stitchable_model_forward.1} parent=27 // pred_check
        %p153 = pneg %p30
      $region30: #{stitchable_model_forward.1} parent=27 // pred_check_branch
        %155 = sbr.rel (%p153) target = $region32
      $region31: #{stitchable_model_forward.1} parent=27 // pred_region
        %p156 = scmp.lt.s32.totalorder %s10, 1
        %s157 = scalar_select %p156, %s10, 1
        %s158 = smul.addr %s157, 2
        %s159 = smul.addr %s158, 4
        %s160 = scalar_lea.vmem %s0, %s159
      $region32: #{stitchable_model_forward.1} parent=27 // pred_fallthru
        _
    $region28: #{stitchable_model_forward.1} parent=5 // pred_fallthru
      _
    %p161 = scmp.le.s32.totalorder 1, %s10
    %p162 = scmp.lt.s32.totalorder %s10, 3
    %p163 = pnand %p161, %p162
    %p164 = pneg %p163
    // Predicated region
    $region33: #{stitchable_model_forward.1} parent=5 // pred_check
      _
    $region34: #{stitchable_model_forward.1} parent=5 // pred_check_branch
      %166 = sbr.rel (%p163) target = $region36
    $region35: #{stitchable_model_forward.1} parent=5 // pred_region
      %s167 = ssub.s32 %s10, 1
      %p168 = scmp.lt.s32.totalorder %s15, 1
      %s169 = scalar_select %p168, %s15, 1
      %s170 = smul.addr %s169, 2
      %s171 = smul.addr %s170, 4
      %s172 = scalar_lea.vmem %s0, %s171
      %p173 = pneg %p36
      %p174 = pneg %p33
      %p175 = pneg %p57
      %p176 = pneg %p54
      %p177 = pneg %p78
      %p178 = pneg %p75
      %p179 = pneg %p99
      %p180 = pneg %p96
      %p181 = pneg %p125
      %p182 = pneg %p122
      %p183 = scmp.lt.s32.totalorder %s15, 1
      %s184 = scalar_select %p183, %s15, 1
      %s185 = smul.addr %s184, 2
      %s186 = smul.addr %s185, 4
      %s187 = scalar_lea.vmem %s4, %s186
      %p188 = scmp.lt.s32.totalorder %s15, 1
      %s189 = scalar_select %p188, %s15, 1
      %s190 = smul.addr %s189, 2
      %s191 = smul.addr %s190, 4
      %s192 = scalar_lea.vmem %s0, %s191
      %p193 = scmp.lt.s32.totalorder %s15, 1
      %s194 = scalar_select %p193, %s15, 1
      %s195 = smul.addr %s194, 2
      %s196 = smul.addr %s195, 4
      %s197 = scalar_lea.vmem %s4, %s196
      %199 = vst [vmem:[#allocation2] sm:$0xf] 0.0
      %200 = vst [vmem:[#allocation2 + $0xc] sm:$0xf] 0.0
      %v201 = vld [vmem:[%s3] sm:$0x3]
      %v203 = vlaneseq
      %v204 = vshrl.u32 %v203, 7
      %v205 = vsub.s32 0, %v204
      %v206 = vrot.slane %v201, %v205
      %v207 = vlaneseq
      %v208 = vshrl.u32 %v207, 7
      %v209 = vsub.s32 1, %v208
      %v210 = vrot.slane %v201, %v209
      %s211 = scalar_lea.vmem %s3, 2
      %v212 = vld [vmem:[%s211] sm:$0x3]
      %v214 = vlaneseq
      %v215 = vshrl.u32 %v214, 7
      %v216 = vsub.s32 0, %v215
      %v217 = vrot.slane %v212, %v216
      %v218 = vlaneseq
      %v219 = vshrl.u32 %v218, 7
      %v220 = vsub.s32 1, %v219
      %v221 = vrot.slane %v212, %v220
      %v222 = vld [vmem:[%s192] sm:$0xff]
      %223 = vst [vmem:[#allocation2 + $0x4] sm:$0xff] %v222
      %v224 = vld [vmem:[#allocation2] sm:$0xff]
      %v225 = vld [vmem:[#allocation2 + $0x8] sm:$0xf]
      %v226 = vcombine.low %v206, %v210
      %227 = vrot.lane.b32.xlu0 %v226, 111
      %v228 = vpop.permute.xlu0 %227
      %v229 = vrot.slane %v228, 4
      %vm230 = vcmask 908288
      %v231 = vsel %vm230, %v229, %v228
      %v234 = vmul.f32 %v224, %v231
      %v235 = vmul.f32 %v225, %v229
      %v238 = vcombine.high %v234, %v234
      %239 = vrot.lane.b32.xlu0 %v234, 17
      %v240 = vpop.permute.xlu0 %239
      %241 = vrot.lane.b32.xlu0 %v238, 17
      %v242 = vpop.permute.xlu0 %241
      %243 = vrot.lane.b32.xlu0 %v235, 17
      %v244 = vpop.permute.xlu0 %243
      %vm245 = vcmask 138240
      %v246 = vsel %vm245, %v240, %v242
      %v247 = vsel %vm245, %v242, %v244
      %250 = vst [vmem:[#allocation3] sm:$0xf] %v246
      %251 = vst [vmem:[#allocation3 + $0x8] sm:$0xf] %v247
      %v252 = vld [vmem:[#allocation2] sm:$0xff]
      %v253 = vld [vmem:[#allocation2 + $0x8] sm:$0xf]
      %v256 = vcombine.low %v252, %v252
      %v257 = vcombine.low %v253, %v253
      %258 = vrot.lane.b32.xlu0 %v256, 16
      %v259 = vpop.permute.xlu0 %258
      %260 = vrot.lane.b32.xlu0 %v252, 16
      %v261 = vpop.permute.xlu0 %260
      %262 = vrot.lane.b32.xlu0 %v257, 16
      %v263 = vpop.permute.xlu0 %262
      %vm264 = vcmask 130048
      %v265 = vsel %vm264, %v259, %v261
      %v266 = vsel %vm264, %v261, %v263
      %269 = vst [vmem:[#allocation3] sm:$0xf0] %v265
      %270 = vst [vmem:[#allocation3 + $0x8] sm:$0xf0] %v266
      %v271 = vld [vmem:[#allocation2] sm:$0xff]
      %v272 = vld [vmem:[#allocation2 + $0x8] sm:$0xf]
      %v273 = vcombine.low %v217, %v221
      %274 = vrot.lane.b32.xlu0 %v273, 113
      %v275 = vpop.permute.xlu0 %274
      %v276 = vrot.slane %v275, 4
      %vm277 = vcmask 924672
      %v278 = vsel %vm277, %v276, %v275
      %v281 = vmul.f32 %v271, %v278
      %v282 = vmul.f32 %v272, %v276
      %v285 = vcombine.high %v281, %v281
      %286 = vrot.lane.b32.xlu0 %v281, 15
      %v287 = vpop.permute.xlu0 %286
      %288 = vrot.lane.b32.xlu0 %v285, 15
      %v289 = vpop.permute.xlu0 %288
      %290 = vrot.lane.b32.xlu0 %v282, 15
      %v291 = vpop.permute.xlu0 %290
      %vm292 = vcmask 121856
      %v293 = vsel %vm292, %v287, %v289
      %v294 = vsel %vm292, %v289, %v291
      %297 = vst [vmem:[#allocation3 + $0x10] sm:$0xf] %v293
      %298 = vst [vmem:[#allocation3 + $0x18] sm:$0xf] %v294
      %v299 = vld [vmem:[#allocation2] sm:$0xff]
      %v300 = vld [vmem:[#allocation2 + $0x8] sm:$0xf]
      %301 = vrot.lane.b32.xlu0 %v226, 127
      %v302 = vpop.permute.xlu0 %301
      %v303 = vrot.slane %v302, 4
      %vm304 = vcmask 1039360
      %v305 = vsel %vm304, %v303, %v302
      %v308 = vmul.f32 %v299, %v305
      %v309 = vmul.f32 %v300, %v303
      %v312 = vcombine.low %v308, %v308
      %v313 = vcombine.low %v309, %v309
      %314 = vrot.lane.b32.xlu0 %v312, 1
      %v315 = vpop.permute.xlu0 %314
      %316 = vrot.lane.b32.xlu0 %v308, 1
      %v317 = vpop.permute.xlu0 %316
      %318 = vrot.lane.b32.xlu0 %v313, 1
      %v319 = vpop.permute.xlu0 %318
      %vm320 = vcmask 7168
      %v321 = vsel %vm320, %v315, %v317
      %v322 = vsel %vm320, %v317, %v319
      %325 = vst [vmem:[#allocation3 + $0x10] sm:$0xf0] %v321
      %326 = vst [vmem:[#allocation3 + $0x18] sm:$0xf0] %v322
      %v327 = vld [vmem:[#allocation2 + $0x4] sm:$0xff]
      %v329 = vcombine.high %v327, %v327
      %331 = vst [vmem:[#allocation3 + $0x20] sm:$0xf] %v327
      %332 = vst [vmem:[#allocation3 + $0x28] sm:$0xf] %v329
      %v333 = vld [vmem:[#allocation2 + $0x4] sm:$0xff]
      %v334 = vld [vmem:[#allocation2 + $0xc] sm:$0xf]
      %335 = vrot.lane.b32.xlu0 %v273, 1
      %v336 = vpop.permute.xlu0 %335
      %v337 = vrot.slane %v336, 4
      %v338 = vsel %vm320, %v337, %v336
      %v341 = vmul.f32 %v333, %v338
      %v342 = vmul.f32 %v334, %v337
      %v345 = vcombine.low %v341, %v341
      %v346 = vcombine.low %v342, %v342
      %347 = vrot.lane.b32.xlu0 %v345, 127
      %v348 = vpop.permute.xlu0 %347
      %349 = vrot.lane.b32.xlu0 %v341, 127
      %v350 = vpop.permute.xlu0 %349
      %351 = vrot.lane.b32.xlu0 %v346, 127
      %v352 = vpop.permute.xlu0 %351
      %v353 = vsel %vm304, %v348, %v350
      %v354 = vsel %vm304, %v350, %v352
      %357 = vst [vmem:[#allocation3 + $0x20] sm:$0xf0] %v353
      %358 = vst [vmem:[#allocation3 + $0x28] sm:$0xf0] %v354
      %v359 = vld [vmem:[#allocation2 + $0x4] sm:$0xff]
      %v360 = vld [vmem:[#allocation2 + $0xc] sm:$0xf]
      %361 = vrot.lane.b32.xlu0 %v226, 15
      %v362 = vpop.permute.xlu0 %361
      %v363 = vrot.slane %v362, 4
      %v364 = vsel %vm292, %v363, %v362
      %v367 = vmul.f32 %v359, %v364
      %v368 = vmul.f32 %v360, %v363
      %v371 = vcombine.high %v367, %v367
      %372 = vrot.lane.b32.xlu0 %v367, 113
      %v373 = vpop.permute.xlu0 %372
      %374 = vrot.lane.b32.xlu0 %v371, 113
      %v375 = vpop.permute.xlu0 %374
      %376 = vrot.lane.b32.xlu0 %v368, 113
      %v377 = vpop.permute.xlu0 %376
      %v378 = vsel %vm277, %v373, %v375
      %v379 = vsel %vm277, %v375, %v377
      %382 = vst [vmem:[#allocation3 + $0x30] sm:$0xf] %v378
      %383 = vst [vmem:[#allocation3 + $0x38] sm:$0xf] %v379
      %v384 = vld [vmem:[#allocation2 + $0x4] sm:$0xff]
      %v385 = vld [vmem:[#allocation2 + $0xc] sm:$0xf]
      %v388 = vcombine.low %v384, %v384
      %v389 = vcombine.low %v385, %v385
      %390 = vrot.lane.b32.xlu0 %v388, 112
      %v391 = vpop.permute.xlu0 %390
      %392 = vrot.lane.b32.xlu0 %v384, 112
      %v393 = vpop.permute.xlu0 %392
      %394 = vrot.lane.b32.xlu0 %v389, 112
      %v395 = vpop.permute.xlu0 %394
      %vm396 = vcmask 916480
      %v397 = vsel %vm396, %v391, %v393
      %v398 = vsel %vm396, %v393, %v395
      %401 = vst [vmem:[#allocation3 + $0x30] sm:$0xf0] %v397
      %402 = vst [vmem:[#allocation3 + $0x38] sm:$0xf0] %v398
      %v403 = vld [vmem:[#allocation2 + $0x4] sm:$0xff]
      %v404 = vld [vmem:[#allocation2 + $0xc] sm:$0xf]
      %405 = vrot.lane.b32.xlu0 %v273, 17
      %v406 = vpop.permute.xlu0 %405
      %v407 = vrot.slane %v406, 4
      %v408 = vsel %vm245, %v407, %v406
      %v411 = vmul.f32 %v403, %v408
      %v412 = vmul.f32 %v404, %v407
      %v415 = vcombine.high %v411, %v411
      %416 = vrot.lane.b32.xlu0 %v411, 111
      %v417 = vpop.permute.xlu0 %416
      %418 = vrot.lane.b32.xlu0 %v415, 111
      %v419 = vpop.permute.xlu0 %418
      %420 = vrot.lane.b32.xlu0 %v412, 111
      %v421 = vpop.permute.xlu0 %420
      %v422 = vsel %vm230, %v417, %v419
      %v423 = vsel %vm230, %v419, %v421
      %426 = vst [vmem:[#allocation3 + $0x40] sm:$0xf] %v422
      %427 = vst [vmem:[#allocation3 + $0x48] sm:$0xf] %v423
      %v428 = vld [vmem:[%s1] sm:$0x3]
      %v429 = vld [vmem:[#allocation3] sm:$0xff]
      %v430 = vld [vmem:[#allocation3 + $0x8] sm:$0xff]
      %v431 = vld [vmem:[#allocation3 + $0x10] sm:$0xff]
      %v432 = vld [vmem:[#allocation3 + $0x18] sm:$0xff]
      %v433 = vld [vmem:[#allocation3 + $0x20] sm:$0xff]
      %v434 = vld [vmem:[#allocation3 + $0x28] sm:$0xff]
      %v435 = vld [vmem:[#allocation3 + $0x30] sm:$0xff]
      %v436 = vld [vmem:[#allocation3 + $0x38] sm:$0xff]
      %v437 = vld [vmem:[#allocation3 + $0x40] sm:$0xf]
      %v438 = vld [vmem:[#allocation3 + $0x48] sm:$0xf]
      %v439 = vpack.c.bf16 %v431, %v429
      %v440 = vpack.c.bf16 %v432, %v430
      %v441 = vpack.c.bf16 %v435, %v433
      %v442 = vpack.c.bf16 %v436, %v434
      %v443 = vpack.c.bf16 %v437, %v437
      %v444 = vpack.c.bf16 %v438, %v438
      %v445 = vld [vmem:[%s2] sm:$0xf]
      %447 = vset.pattern.permute.xlu0 0
      %448 = vperm.xlu0 %447, %v445
      %v449 = vpop.permute.xlu0 %448
      %vm451 = vcmask 293888
      %v453 = vsel %vm451, %v428, 0
      %vm455 = vcmask 1041408
      %v457 = vsel %vm455, %v443, 0
      %v460 = vsel %vm455, %v444, 0
      %462 = vmatprep.subr.bf16.mxu0 %v440
      %463 = vmatpush1.bf16.msra.mxu0 %v439
      %464 = vmatprep.subr.bf16.mxu0 %v442
      %465 = vmatpush1.bf16.msra.mxu0 %v441
      %466 = vmatprep.subr.bf16.mxu0 %v460
      %467 = vmatpush1.bf16.msra.mxu0 %v457
      %468 = vmatprep.subr.bf16.mxu0 0
      %469 = vmatpush1.bf16.msra.mxu0 0
      %470 = vmatprep.subr.bf16.mxu0 0
      %471 = vmatpush1.bf16.msra.mxu0 0
      %472 = vmatprep.subr.bf16.mxu0 0
      %473 = vmatpush1.bf16.msra.mxu0 0
      %474 = vmatprep.subr.bf16.mxu0 0
      %475 = vmatpush1.bf16.msra.mxu0 0
      %476 = vmatprep.subr.bf16.mxu0 0
      %477 = vmatpush1.bf16.msra.mxu0 0
      %478 = vmatprep.subr.bf16.mxu0 0
      %479 = vmatpush1.bf16.msra.mxu0 0
      %480 = vmatprep.subr.bf16.mxu0 0
      %481 = vmatpush1.bf16.msra.mxu0 0
      %482 = vmatprep.subr.bf16.mxu0 0
      %483 = vmatpush1.bf16.msra.mxu0 0
      %484 = vmatprep.subr.bf16.mxu0 0
      %485 = vmatpush1.bf16.msra.mxu0 0
      %486 = vmatprep.subr.bf16.mxu0 0
      %487 = vmatpush1.bf16.msra.mxu0 0
      %488 = vmatprep.subr.bf16.mxu0 0
      %489 = vmatpush1.bf16.msra.mxu0 0
      %490 = vmatprep.subr.bf16.mxu0 0
      %491 = vmatpush1.bf16.msra.mxu0 0
      %492 = vmatprep.subr.bf16.mxu0 0
      %493 = vmatpush1.bf16.msra.mxu0 0
      %494 = vmatprep.mubr.bf16.mxu0 0
      %495 = vmatmul.mubr.bf16.gmra.mrb[0].mxu0 %v453
      %v496 = vpop.f32.mrb[0].mxu0
      %v497 = vadd.f32 %v449, %v496
      %v498 = vpop.f32.mrb[0].mxu0
      %v499 = vadd.f32 %v449, %v498
      %v500 = vpop.f32.mrb[0].mxu0
      %v501 = vpop.f32.mrb[0].mxu0
      %502 = vdwg.mxu0
      %v505 = vcombine.low %v497, %v499
      %507 = vst [vmem:[#allocation2 + $0x4] sm:$0xff] %v505
      %v508 = vld [vmem:[#allocation2] sm:$0xff]
      %v509 = vld [vmem:[#allocation2 + $0x8] sm:$0xf]
      %v510 = vmul.f32 %v508, %v231
      %v511 = vmul.f32 %v509, %v229
      %v514 = vcombine.high %v510, %v510
      %515 = vrot.lane.b32.xlu0 %v510, 17
      %v516 = vpop.permute.xlu0 %515
      %517 = vrot.lane.b32.xlu0 %v514, 17
      %v518 = vpop.permute.xlu0 %517
      %519 = vrot.lane.b32.xlu0 %v511, 17
      %v520 = vpop.permute.xlu0 %519
      %v521 = vsel %vm245, %v516, %v518
      %v522 = vsel %vm245, %v518, %v520
      %525 = vst [vmem:[#allocation3] sm:$0xf] %v521
      %526 = vst [vmem:[#allocation3 + $0x8] sm:$0xf] %v522
      %v527 = vld [vmem:[#allocation2] sm:$0xff]
      %v528 = vld [vmem:[#allocation2 + $0x8] sm:$0xf]
      %v531 = vcombine.low %v527, %v527
      %v532 = vcombine.low %v528, %v528
      %533 = vrot.lane.b32.xlu0 %v531, 16
      %v534 = vpop.permute.xlu0 %533
      %535 = vrot.lane.b32.xlu0 %v527, 16
      %v536 = vpop.permute.xlu0 %535
      %537 = vrot.lane.b32.xlu0 %v532, 16
      %v538 = vpop.permute.xlu0 %537
      %v539 = vsel %vm264, %v534, %v536
      %v540 = vsel %vm264, %v536, %v538
      %543 = vst [vmem:[#allocation3] sm:$0xf0] %v539
      %544 = vst [vmem:[#allocation3 + $0x8] sm:$0xf0] %v540
      %v545 = vld [vmem:[#allocation2] sm:$0xff]
      %v546 = vld [vmem:[#allocation2 + $0x8] sm:$0xf]
      %v547 = vmul.f32 %v545, %v278
      %v548 = vmul.f32 %v546, %v276
      %v551 = vcombine.high %v547, %v547
      %552 = vrot.lane.b32.xlu0 %v547, 15
      %v553 = vpop.permute.xlu0 %552
      %554 = vrot.lane.b32.xlu0 %v551, 15
      %v555 = vpop.permute.xlu0 %554
      %556 = vrot.lane.b32.xlu0 %v548, 15
      %v557 = vpop.permute.xlu0 %556
      %v558 = vsel %vm292, %v553, %v555
      %v559 = vsel %vm292, %v555, %v557
      %562 = vst [vmem:[#allocation3 + $0x10] sm:$0xf] %v558
      %563 = vst [vmem:[#allocation3 + $0x18] sm:$0xf] %v559
      %v564 = vld [vmem:[#allocation2] sm:$0xff]
      %v565 = vld [vmem:[#allocation2 + $0x8] sm:$0xf]
      %v566 = vmul.f32 %v564, %v305
      %v567 = vmul.f32 %v565, %v303
      %v570 = vcombine.low %v566, %v566
      %v571 = vcombine.low %v567, %v567
      %572 = vrot.lane.b32.xlu0 %v570, 1
      %v573 = vpop.permute.xlu0 %572
      %574 = vrot.lane.b32.xlu0 %v566, 1
      %v575 = vpop.permute.xlu0 %574
      %576 = vrot.lane.b32.xlu0 %v571, 1
      %v577 = vpop.permute.xlu0 %576
      %v578 = vsel %vm320, %v573, %v575
      %v579 = vsel %vm320, %v575, %v577
      %582 = vst [vmem:[#allocation3 + $0x10] sm:$0xf0] %v578
      %583 = vst [vmem:[#allocation3 + $0x18] sm:$0xf0] %v579
      %v584 = vld [vmem:[#allocation2 + $0x4] sm:$0xff]
      %v586 = vcombine.high %v584, %v584
      %588 = vst [vmem:[#allocation3 + $0x20] sm:$0xf] %v584
      %589 = vst [vmem:[#allocation3 + $0x28] sm:$0xf] %v586
      %v590 = vld [vmem:[#allocation2 + $0x4] sm:$0xff]
      %v591 = vld [vmem:[#allocation2 + $0xc] sm:$0xf]
      %v592 = vmul.f32 %v590, %v338
      %v593 = vmul.f32 %v591, %v337
      %v596 = vcombine.low %v592, %v592
      %v597 = vcombine.low %v593, %v593
      %598 = vrot.lane.b32.xlu0 %v596, 127
      %v599 = vpop.permute.xlu0 %598
      %600 = vrot.lane.b32.xlu0 %v592, 127
      %v601 = vpop.permute.xlu0 %600
      %602 = vrot.lane.b32.xlu0 %v597, 127
      %v603 = vpop.permute.xlu0 %602
      %v604 = vsel %vm304, %v599, %v601
      %v605 = vsel %vm304, %v601, %v603
      %608 = vst [vmem:[#allocation3 + $0x20] sm:$0xf0] %v604
      %609 = vst [vmem:[#allocation3 + $0x28] sm:$0xf0] %v605
      %v610 = vld [vmem:[#allocation2 + $0x4] sm:$0xff]
      %v611 = vld [vmem:[#allocation2 + $0xc] sm:$0xf]
      %v612 = vmul.f32 %v610, %v364
      %v613 = vmul.f32 %v611, %v363
      %v616 = vcombine.high %v612, %v612
      %617 = vrot.lane.b32.xlu0 %v612, 113
      %v618 = vpop.permute.xlu0 %617
      %619 = vrot.lane.b32.xlu0 %v616, 113
      %v620 = vpop.permute.xlu0 %619
      %621 = vrot.lane.b32.xlu0 %v613, 113
      %v622 = vpop.permute.xlu0 %621
      %v623 = vsel %vm277, %v618, %v620
      %v624 = vsel %vm277, %v620, %v622
      %627 = vst [vmem:[#allocation3 + $0x30] sm:$0xf] %v623
      %628 = vst [vmem:[#allocation3 + $0x38] sm:$0xf] %v624
      %v629 = vld [vmem:[#allocation2 + $0x4] sm:$0xff]
      %v630 = vld [vmem:[#allocation2 + $0xc] sm:$0xf]
      %v633 = vcombine.low %v629, %v629
      %v634 = vcombine.low %v630, %v630
      %635 = vrot.lane.b32.xlu0 %v633, 112
      %v636 = vpop.permute.xlu0 %635
      %637 = vrot.lane.b32.xlu0 %v629, 112
      %v638 = vpop.permute.xlu0 %637
      %639 = vrot.lane.b32.xlu0 %v634, 112
      %v640 = vpop.permute.xlu0 %639
      %v641 = vsel %vm396, %v636, %v638
      %v642 = vsel %vm396, %v638, %v640
      %645 = vst [vmem:[#allocation3 + $0x30] sm:$0xf0] %v641
      %646 = vst [vmem:[#allocation3 + $0x38] sm:$0xf0] %v642
      %v647 = vld [vmem:[#allocation2 + $0x4] sm:$0xff]
      %v648 = vld [vmem:[#allocation2 + $0xc] sm:$0xf]
      %v649 = vmul.f32 %v647, %v408
      %v650 = vmul.f32 %v648, %v407
      %v653 = vcombine.high %v649, %v649
      %654 = vrot.lane.b32.xlu0 %v649, 111
      %v655 = vpop.permute.xlu0 %654
      %656 = vrot.lane.b32.xlu0 %v653, 111
      %v657 = vpop.permute.xlu0 %656
      %658 = vrot.lane.b32.xlu0 %v650, 111
      %v659 = vpop.permute.xlu0 %658
      %v660 = vsel %vm230, %v655, %v657
      %v661 = vsel %vm230, %v657, %v659
      %664 = vst [vmem:[#allocation3 + $0x40] sm:$0xf] %v660
      %665 = vst [vmem:[#allocation3 + $0x48] sm:$0xf] %v661
      %s666 = scalar_lea.vmem %s1, 2
      %v667 = vld [vmem:[%s666] sm:$0x3]
      %v668 = vld [vmem:[#allocation3] sm:$0xff]
      %v669 = vld [vmem:[#allocation3 + $0x8] sm:$0xff]
      %v670 = vld [vmem:[#allocation3 + $0x10] sm:$0xff]
      %v671 = vld [vmem:[#allocation3 + $0x18] sm:$0xff]
      %v672 = vld [vmem:[#allocation3 + $0x20] sm:$0xff]
      %v673 = vld [vmem:[#allocation3 + $0x28] sm:$0xff]
      %v674 = vld [vmem:[#allocation3 + $0x30] sm:$0xff]
      %v675 = vld [vmem:[#allocation3 + $0x38] sm:$0xff]
      %v676 = vld [vmem:[#allocation3 + $0x40] sm:$0xf]
      %v677 = vld [vmem:[#allocation3 + $0x48] sm:$0xf]
      %v678 = vpack.c.bf16 %v670, %v668
      %v679 = vpack.c.bf16 %v671, %v669
      %v680 = vpack.c.bf16 %v674, %v672
      %v681 = vpack.c.bf16 %v675, %v673
      %v682 = vpack.c.bf16 %v676, %v676
      %v683 = vpack.c.bf16 %v677, %v677
      %s684 = scalar_lea.vmem %s2, 4
      %v685 = vld [vmem:[%s684] sm:$0xf]
      %687 = vset.pattern.permute.xlu0 0
      %688 = vperm.xlu0 %687, %v685
      %v689 = vpop.permute.xlu0 %688
      %v692 = vsel %vm451, %v667, 0
      %v695 = vsel %vm455, %v682, 0
      %v698 = vsel %vm455, %v683, 0
      %700 = vmatprep.subr.bf16.mxu0 %v679
      %701 = vmatpush1.bf16.msra.mxu0 %v678
      %702 = vmatprep.subr.bf16.mxu0 %v681
      %703 = vmatpush1.bf16.msra.mxu0 %v680
      %704 = vmatprep.subr.bf16.mxu0 %v698
      %705 = vmatpush1.bf16.msra.mxu0 %v695
      %706 = vmatprep.subr.bf16.mxu0 0
      %707 = vmatpush1.bf16.msra.mxu0 0
      %708 = vmatprep.subr.bf16.mxu0 0
      %709 = vmatpush1.bf16.msra.mxu0 0
      %710 = vmatprep.subr.bf16.mxu0 0
      %711 = vmatpush1.bf16.msra.mxu0 0
      %712 = vmatprep.subr.bf16.mxu0 0
      %713 = vmatpush1.bf16.msra.mxu0 0
      %714 = vmatprep.subr.bf16.mxu0 0
      %715 = vmatpush1.bf16.msra.mxu0 0
      %716 = vmatprep.subr.bf16.mxu0 0
      %717 = vmatpush1.bf16.msra.mxu0 0
      %718 = vmatprep.subr.bf16.mxu0 0
      %719 = vmatpush1.bf16.msra.mxu0 0
      %720 = vmatprep.subr.bf16.mxu0 0
      %721 = vmatpush1.bf16.msra.mxu0 0
      %722 = vmatprep.subr.bf16.mxu0 0
      %723 = vmatpush1.bf16.msra.mxu0 0
      %724 = vmatprep.subr.bf16.mxu0 0
      %725 = vmatpush1.bf16.msra.mxu0 0
      %726 = vmatprep.subr.bf16.mxu0 0
      %727 = vmatpush1.bf16.msra.mxu0 0
      %728 = vmatprep.subr.bf16.mxu0 0
      %729 = vmatpush1.bf16.msra.mxu0 0
      %730 = vmatprep.subr.bf16.mxu0 0
      %731 = vmatpush1.bf16.msra.mxu0 0
      %732 = vmatprep.mubr.bf16.mxu0 0
      %733 = vmatmul.mubr.bf16.gmra.mrb[0].mxu0 %v692
      %v734 = vpop.f32.mrb[0].mxu0
      %v735 = vadd.f32 %v689, %v734
      %v736 = vpop.f32.mrb[0].mxu0
      %v737 = vadd.f32 %v689, %v736
      %v738 = vpop.f32.mrb[0].mxu0
      %v739 = vpop.f32.mrb[0].mxu0
      %740 = vdwg.mxu0
      %v743 = vcombine.low %v735, %v737
      %745 = vst [vmem:[%s197] sm:$0xff] %v743
      %p746 = scmp.lt.s32.totalorder %s15, 1
      %s747 = scalar_select %p746, %s15, 1
      %s748 = smul.addr %s747, 2
      %s749 = smul.addr %s748, 4
      %s750 = scalar_lea.vmem %s4, %s749
      // Predicated region
      $region37: #{stitchable_model_forward.1} parent=35 // pred_check
        %p751 = pneg %p122
      $region38: #{stitchable_model_forward.1} parent=35 // pred_check_branch
        %753 = sbr.rel (%p751) target = $region40
      $region39: #{stitchable_model_forward.1} parent=35 // pred_region
        _
      $region40: #{stitchable_model_forward.1} parent=35 // pred_fallthru
        _
    $region36: #{stitchable_model_forward.1} parent=5 // pred_fallthru
      _
    %p754 = scmp.le.s32.totalorder 2, %s10
    // Predicated region
    $region41: #{stitchable_model_forward.1} parent=5 // pred_check
      %p755 = pneg %p754
    $region42: #{stitchable_model_forward.1} parent=5 // pred_check_branch
      %757 = sbr.rel (%p755) target = $region44
    $region43: #{stitchable_model_forward.1} parent=5 // pred_region
      %s758 = ssub.s32 %s10, 2
      // Predicated region
      $region45: #{stitchable_model_forward.1} parent=43 // pred_check
        %p759 = pneg %p128
      $region46: #{stitchable_model_forward.1} parent=43 // pred_check_branch
        %761 = sbr.rel (%p759) target = $region48
      $region47: #{stitchable_model_forward.1} parent=43 // pred_region
        %p762 = scmp.lt.s32.totalorder %s16, 1
        %s763 = scalar_select %p762, %s16, 1
        %s764 = smul.addr %s763, 2
        %s765 = smul.addr %s764, 4
        %s766 = scalar_lea.vmem %s4, %s765
      $region48: #{stitchable_model_forward.1} parent=43 // pred_fallthru
        _
    $region44: #{stitchable_model_forward.1} parent=5 // pred_fallthru
      _
  $region6: #{stitchable_model_forward.1} parent=0 // loop_footer
    %s14 = sadd.s32 1, %s10
  $region7: #{stitchable_model_forward.1} parent=0 // loop_footer_branch
    %9 = sbr.rel target = $region3
  $region8: #{stitchable_model_forward.1} parent=0 // loop_exit
    _

</llo_original>
